<compile_context>
chip_gen: v6e
topology: v6e:2x2x1
jax: 0.10.0
libtpu: 0.0.40
codegen_flags: <defaults>
</compile_context>

<pallas_src>
import functools

import jax
import jax.numpy as jnp
from jax.experimental import pallas as pl
from jax.experimental.pallas import tpu as pltpu


def _round_up(x, m):
    return (x + m - 1) // m * m


# --------------------------------------------------------------------------- #
# Kernel
# --------------------------------------------------------------------------- #
def _head_kernel(
    x_ref,                        # (tm, H)          f32   (cast to bf16 in-kernel)
    w1_ref, b1_ref,               # (H, 2H) bf16 / (1, 2H) f32
    w2_ref, b2_ref,               # (H, 2H) or (2H, 2H) bf16 / (1, 2H) f32
    w3a_ref, w3b_ref,             # (H, Ncls_pad), (2H, 128) bf16
    bcls_ref, bbox_ref,           # (1, Ncls_pad), (1, 128) f32
    cls_ref,                      # (tm, Ncls_pad)   f32
    box_ref,                      # (tm, 128)        f32
    *, hidden, split_l2,
):
    # Cast on the VPU (free under the MXU); HBM is read once as f32.
    x = x_ref[...].astype(jnp.bfloat16)

    # Class logits straight from x (lane-dense, zero-padded to a 128 multiple).
    cls_ref[...] = (
        jnp.dot(x, w3a_ref[...], preferred_element_type=jnp.float32) + bcls_ref[...]
    )

    # Fused layer-1 of both box MLPs: columns [0:H] = obj, [H:2H] = sub.
    h1 = jnp.dot(x, w1_ref[...], preferred_element_type=jnp.float32) + b1_ref[...]
    h1 = jnp.maximum(h1, 0.0).astype(jnp.bfloat16)

    if split_l2:
        # H is a multiple of 128: the half-slices are lane-aligned (free) and
        # the two H x H matmuls skip the zero half of the block-diagonal form.
        H = hidden
        h2o = (
            jnp.dot(h1[:, :H], w2_ref[:, :H], preferred_element_type=jnp.float32)
            + b2_ref[:, :H]
        )
        h2s = (
            jnp.dot(h1[:, H:], w2_ref[:, H:], preferred_element_type=jnp.float32)
            + b2_ref[:, H:]
        )
        h2o = jnp.maximum(h2o, 0.0).astype(jnp.bfloat16)
        h2s = jnp.maximum(h2s, 0.0).astype(jnp.bfloat16)
        box = (
            jnp.dot(h2o, w3b_ref[:H, :], preferred_element_type=jnp.float32)
            + jnp.dot(h2s, w3b_ref[H:, :], preferred_element_type=jnp.float32)
            + bbox_ref[...]
        )
    else:
        # Fused (block-diagonal) layer-2 of both box MLPs.
        h2 = jnp.dot(h1, w2_ref[...], preferred_element_type=jnp.float32) + b2_ref[...]
        h2 = jnp.maximum(h2, 0.0).astype(jnp.bfloat16)
        box = jnp.dot(h2, w3b_ref[...], preferred_element_type=jnp.float32) + bbox_ref[...]

    # Sigmoid on the single 128-lane box slab only (cols 0:4 sub, 4:8 obj).
    box_ref[...] = jax.nn.sigmoid(box)


# --------------------------------------------------------------------------- #
# Tile / VMEM heuristics
# --------------------------------------------------------------------------- #
def _pick_tile(m_align, tm):
    """Row-tile size: big tiles for weight reuse, but >=2 grid steps for large M
    so the single 'parallel' axis can shard across v7x's two TensorCores."""
    if m_align <= 256:
        return m_align                      # one grid step (m_align is a multiple of 8)
    half = _round_up(pl.cdiv(m_align, 2), 256)
    return max(256, min(tm, half))


def _vmem_estimate(tm, H, ncls_pad, split_l2):
    two_h = 2 * H
    w2_elems = (H if split_l2 else two_h) * two_h
    wbytes = 2 * (H * two_h + w2_elems + H * ncls_pad + two_h * 128)   # bf16 weights
    bbytes = 4 * (two_h + two_h + ncls_pad + 128)                      # f32 biases
    io = 4 * tm * (H + ncls_pad + 128)                                 # x + both outputs
    interm = 4 * tm * two_h                                            # h1 / h2 live values
    # inputs & outputs are double-buffered by the pipeline
    return 2 * (wbytes + bbytes + io) + 2 * interm


# --------------------------------------------------------------------------- #
# pallas_call wrapper
# --------------------------------------------------------------------------- #
def class_head_pallas(feat_flat, fused, *, tm=1024):
    """feat_flat: [M, H] f32.  Returns (cls_slab [M, Ncls_pad], box_slab [M, 128]) f32."""
    M, H = feat_flat.shape
    ncls_pad = fused["ncls_pad"]
    two_h = 2 * H
    split_l2 = fused["split_l2"]
    w2_shape = fused["w2"].shape

    # Only pad rows up to the sublane multiple (<= 7 extra rows); the grid uses
    # pl.cdiv so no full tile-width padding pass over HBM is needed.
    m_align = _round_up(M, 8)
    x = feat_flat if m_align == M else jnp.pad(feat_flat, ((0, m_align - M), (0, 0)))

    tm_eff = _pick_tile(m_align, tm)
    grid = (pl.cdiv(m_align, tm_eff),)

    est = _vmem_estimate(tm_eff, H, ncls_pad, split_l2)
    vmem_limit = int(min(est + (4 << 20), 64 << 20)) if est > (12 << 20) else None

    def full2(shape):
        # Grid-invariant weight/bias blocks (whole array, block index (0,0)).
        return pl.BlockSpec(shape, lambda i: (0, 0))

    kern = functools.partial(_head_kernel, hidden=H, split_l2=split_l2)
    cls_slab, box_slab = pl.pallas_call(
        kern,
        grid=grid,
        in_specs=[
            pl.BlockSpec((tm_eff, H), lambda i: (i, 0)),   # feat row tile (f32)
            full2((H, two_h)), full2((1, two_h)),          # fused layer-1
            full2(w2_shape), full2((1, two_h)),            # layer-2 (split or block-diag)
            full2((H, ncls_pad)),                          # class projection
            full2((two_h, 128)),                           # box projections
            full2((1, ncls_pad)), full2((1, 128)),         # biases
        ],
        out_specs=[
            pl.BlockSpec((tm_eff, ncls_pad), lambda i: (i, 0)),
            pl.BlockSpec((tm_eff, 128), lambda i: (i, 0)),
        ],
        out_shape=(
            jax.ShapeDtypeStruct((m_align, ncls_pad), jnp.float32),
            jax.ShapeDtypeStruct((m_align, 128), jnp.float32),
        ),
        compiler_params=pltpu.CompilerParams(
            dimension_semantics=("parallel",),
            vmem_limit_bytes=vmem_limit,
        ),
    )(
        x,
        fused["w1"], fused["b1"],
        fused["w2"], fused["b2"],
        fused["w3a"], fused["w3b"],
        fused["bcls"], fused["bbox"],
    )
    return cls_slab[:M], box_slab[:M]


# --------------------------------------------------------------------------- #
# Parameter packing (done once, outside the kernel)
# --------------------------------------------------------------------------- #
def fuse_params(params, split_l2=None):
    """Pack per-layer params into the fused/zero-padded kernel operands."""
    H, c1 = params["wc"].shape
    ncls_pad = _round_up(c1, 128)
    if split_l2 is None:
        # Split layer-2 only when the half-slices are lane-aligned.
        split_l2 = (H % 128 == 0)
    f32, bf16 = jnp.float32, jnp.bfloat16

    # Layer 1: [obj | sub]
    w1 = jnp.concatenate([params["ow1"], params["sw1"]], axis=1)   # [H, 2H]
    b1 = jnp.concatenate([params["ob1"], params["sb1"]], axis=1)   # [1, 2H]

    # Layer 2: either two packed H x H blocks or a zero-padded block-diagonal.
    if split_l2:
        w2 = jnp.concatenate([params["ow2"], params["sw2"]], axis=1)   # [H, 2H]
    else:
        w2 = jnp.zeros((2 * H, 2 * H), f32)
        w2 = w2.at[:H, :H].set(params["ow2"]).at[H:, H:].set(params["sw2"])
    b2 = jnp.concatenate([params["ob2"], params["sb2"]], axis=1)   # [1, 2H]

    # Class projection (lane-dense, zero-padded to a multiple of 128).
    w3a = jnp.zeros((H, ncls_pad), f32).at[:, :c1].set(params["wc"])
    bcls = jnp.zeros((1, ncls_pad), f32).at[:, :c1].set(params["bc"])

    # Box projection into a dedicated 128-lane slab: cols [0:4] sub, [4:8] obj.
    w3b = jnp.zeros((2 * H, 128), f32)
    w3b = w3b.at[H:, 0:4].set(params["sw3"]).at[:H, 4:8].set(params["ow3"])
    bbox = jnp.zeros((1, 128), f32)
    bbox = bbox.at[:, 0:4].set(params["sb3"]).at[:, 4:8].set(params["ob3"])

    return {
        "c1": c1, "hidden": H, "ncls_pad": ncls_pad, "split_l2": split_l2,
        "w1": w1.astype(bf16), "b1": b1,
        "w2": w2.astype(bf16), "b2": b2,
        "w3a": w3a.astype(bf16), "w3b": w3b.astype(bf16),
        "bcls": bcls, "bbox": bbox,
    }


# --------------------------------------------------------------------------- #
# Forward (module semantics: dict + aux_outputs + verb passthrough)
# --------------------------------------------------------------------------- #
def pair_differential_forward(feat, pred_verb_logits, fused, *, tm=1024):
    """feat: [L, B, Q, H]; pred_verb_logits: [L, B, Q, V]."""
    L, B, Q, H = feat.shape
    M = L * B * Q
    c1 = fused["c1"]

    cls_slab, box_slab = class_head_pallas(feat.reshape(M, H), fused, tm=tm)
    outputs_obj_class = cls_slab[:, :c1].reshape(L, B, Q, c1)
    outputs_sub_coord = box_slab[:, 0:4].reshape(L, B, Q, 4)
    outputs_obj_coord = box_slab[:, 4:8].reshape(L, B, Q, 4)

    out = {
        "pred_obj_logits": outputs_obj_class[-1],
        "pred_sub_boxes": outputs_sub_coord[-1],
        "pred_obj_boxes": outputs_obj_coord[-1],
        "pred_verb_logits": pred_verb_logits[-1],
    }
    # aux_loss=True, binary=False
    out["aux_outputs"] = [
        {
            "pred_obj_logits": outputs_obj_class[i],
            "pred_sub_boxes": outputs_sub_coord[i],
            "pred_obj_boxes": outputs_obj_coord[i],
            "pred_verb_logits": pred_verb_logits[i],
        }
        for i in range(L - 1)
    ]
    return out


# --------------------------------------------------------------------------- #
# Parameter init + plain-JAX reference
# --------------------------------------------------------------------------- #
def make_params(key, hidden_dim, num_obj_classes):
    """Deterministic parameter init (nn.Linear-style uniform)."""
    C1 = num_obj_classes + 1
    H = hidden_dim
    names_shapes = [
        ("wc", (H, C1)), ("bc", (1, C1)),
        ("ow1", (H, H)), ("ob1", (1, H)),
        ("ow2", (H, H)), ("ob2", (1, H)),
        ("ow3", (H, 4)), ("ob3", (1, 4)),
        ("sw1", (H, H)), ("sb1", (1, H)),
        ("sw2", (H, H)), ("sb2", (1, H)),
        ("sw3", (H, 4)), ("sb3", (1, 4)),
    ]
    keys = jax.random.split(key, len(names_shapes))
    params = {}
    for (name, shape), k in zip(names_shapes, keys):
        bound = 1.0 / (H ** 0.5)
        params[name] = jax.random.uniform(
            k, shape, dtype=jnp.float32, minval=-bound, maxval=bound
        )
    return params


def _reference_forward(feat, params):
    """Plain-JAX f32 reference of the class head."""
    x = feat
    cls = x @ params["wc"] + params["bc"]

    def mlp(x, w1, b1, w2, b2, w3, b3):
        h = jnp.maximum(x @ w1 + b1, 0.0)
        h = jnp.maximum(h @ w2 + b2, 0.0)
        return jax.nn.sigmoid(h @ w3 + b3)

    obj = mlp(x, params["ow1"], params["ob1"], params["ow2"], params["ob2"],
              params["ow3"], params["ob3"])
    sub = mlp(x, params["sw1"], params["sb1"], params["sw2"], params["sb2"],
              params["sw3"], params["sb3"])
    return cls, sub, obj


def _run_case(key, L, B, Q, H, num_obj_classes, num_verb_classes, tol=5e-2):
    k_feat, k_verb, k_params = jax.random.split(key, 3)
    feat = jax.random.normal(k_feat, (L, B, Q, H), dtype=jnp.float32)
    pred_verb_logits = jax.random.normal(
        k_verb, (L, B, Q, num_verb_classes), dtype=jnp.float32
    )
    params = make_params(k_params, H, num_obj_classes)
    fused = fuse_params(params)

    out = pair_differential_forward(feat, pred_verb_logits, fused)
    out = jax.block_until_ready(out)

    # Correctness check against plain-JAX f32 reference.  Kernel uses bf16
    # weights/activations with f32 accumulation, so tolerance is loosened.
    ref_cls, ref_sub, ref_obj = _reference_forward(feat, params)
    assert jnp.allclose(out["pred_obj_logits"], ref_cls[-1], atol=tol, rtol=tol)
    assert jnp.allclose(out["pred_sub_boxes"], ref_sub[-1], atol=tol, rtol=tol)
    assert jnp.allclose(out["pred_obj_boxes"], ref_obj[-1], atol=tol, rtol=tol)
    assert jnp.allclose(out["pred_verb_logits"], pred_verb_logits[-1])
    assert len(out["aux_outputs"]) == L - 1
    for i, aux in enumerate(out["aux_outputs"]):
        assert jnp.allclose(aux["pred_obj_logits"], ref_cls[i], atol=tol, rtol=tol)
        assert jnp.allclose(aux["pred_sub_boxes"], ref_sub[i], atol=tol, rtol=tol)
        assert jnp.allclose(aux["pred_obj_boxes"], ref_obj[i], atol=tol, rtol=tol)
        assert jnp.allclose(aux["pred_verb_logits"], pred_verb_logits[i])


if __name__ == "__main__":
    key = jax.random.PRNGKey(0)
    k_a, k_b = jax.random.split(key, 2)

    # Case A: small hidden (H not a multiple of 128) -> fused block-diagonal layer-2.
    _run_case(k_a, L=3, B=2, Q=8, H=32, num_obj_classes=16, num_verb_classes=16)

    # Case B: H % 128 == 0 -> split layer-2 (two H x H matmuls), larger class count.
    _run_case(k_b, L=2, B=1, Q=8, H=128, num_obj_classes=80, num_verb_classes=8)

    print("KERNEL_OK")
</pallas_src>

<mosaic_0001>
module attributes {stable_mosaic.version = 11 : i64} {
  func.func @_head_kernel(%arg0: i32, %arg1: memref<48x32xf32, #tpu.memory_space<vmem>>, %arg2: memref<32x64xbf16, #tpu.memory_space<vmem>>, %arg3: memref<1x64xf32, #tpu.memory_space<vmem>>, %arg4: memref<64x64xbf16, #tpu.memory_space<vmem>>, %arg5: memref<1x64xf32, #tpu.memory_space<vmem>>, %arg6: memref<32x128xbf16, #tpu.memory_space<vmem>>, %arg7: memref<64x128xbf16, #tpu.memory_space<vmem>>, %arg8: memref<1x128xf32, #tpu.memory_space<vmem>>, %arg9: memref<1x128xf32, #tpu.memory_space<vmem>>, %arg10: memref<48x128xf32, #tpu.memory_space<vmem>>, %arg11: memref<48x128xf32, #tpu.memory_space<vmem>>) attributes {dimension_semantics = [#tpu.dimension_semantics<parallel>], iteration_bounds = array<i64: 1>, scalar_prefetch = 0 : i64, scratch_operands = 0 : i64, tpu.core_type = #tpu.core_type<tc>, window_params = [{transform_indices = @transform_0, window_bounds = array<i64: 48, 32>}, {pipeline_mode = #tpu.pipeline_mode<synchronous>, transform_indices = @transform_1, window_bounds = array<i64: 32, 64>}, {pipeline_mode = #tpu.pipeline_mode<synchronous>, transform_indices = @transform_2, window_bounds = array<i64: 1, 64>}, {pipeline_mode = #tpu.pipeline_mode<synchronous>, transform_indices = @transform_3, window_bounds = array<i64: 64, 64>}, {pipeline_mode = #tpu.pipeline_mode<synchronous>, transform_indices = @transform_4, window_bounds = array<i64: 1, 64>}, {pipeline_mode = #tpu.pipeline_mode<synchronous>, transform_indices = @transform_5, window_bounds = array<i64: 32, 128>}, {pipeline_mode = #tpu.pipeline_mode<synchronous>, transform_indices = @transform_6, window_bounds = array<i64: 64, 128>}, {pipeline_mode = #tpu.pipeline_mode<synchronous>, transform_indices = @transform_7, window_bounds = array<i64: 1, 128>}, {pipeline_mode = #tpu.pipeline_mode<synchronous>, transform_indices = @transform_8, window_bounds = array<i64: 1, 128>}, {transform_indices = @transform_9, window_bounds = array<i64: 48, 128>}, {transform_indices = @transform_10, window_bounds = array<i64: 48, 128>}]} {
    %c0 = arith.constant 0 : index
    %c0_0 = arith.constant 0 : index
    %0 = vector.load %arg1[%c0, %c0_0] : memref<48x32xf32, #tpu.memory_space<vmem>>, vector<48x32xf32>
    %1 = arith.truncf %0 : vector<48x32xf32> to vector<48x32xbf16>
    %c0_1 = arith.constant 0 : index
    %c0_2 = arith.constant 0 : index
    %2 = vector.load %arg6[%c0_1, %c0_2] : memref<32x128xbf16, #tpu.memory_space<vmem>>, vector<32x128xbf16>
    %cst = arith.constant dense<0.000000e+00> : vector<48x128xf32>
    %3 = tpu.matmul %1, %2, %cst {dimension_numbers = #tpu.dot_dimension_numbers<[1], [0], [0], [1], [0, 0, 1, 1], [], []>} : vector<48x32xbf16>, vector<32x128xbf16>, vector<48x128xf32> -> vector<48x128xf32>
    %c0_3 = arith.constant 0 : index
    %c0_4 = arith.constant 0 : index
    %4 = vector.load %arg8[%c0_3, %c0_4] : memref<1x128xf32, #tpu.memory_space<vmem>>, vector<1x128xf32>
    %5 = vector.broadcast %4 : vector<1x128xf32> to vector<48x128xf32>
    %6 = arith.addf %3, %5 : vector<48x128xf32>
    %c0_5 = arith.constant 0 : index
    %c0_6 = arith.constant 0 : index
    %7 = vector.load %arg10[%c0_5, %c0_6] : memref<48x128xf32, #tpu.memory_space<vmem>>, vector<48x128xf32>
    tpu.vector_store %arg10[%c0_5, %c0_6], %6 {strides = array<i32>} : memref<48x128xf32, #tpu.memory_space<vmem>>, vector<48x128xf32>,
    %c0_7 = arith.constant 0 : index
    %c0_8 = arith.constant 0 : index
    %8 = vector.load %arg2[%c0_7, %c0_8] : memref<32x64xbf16, #tpu.memory_space<vmem>>, vector<32x64xbf16>
    %cst_9 = arith.constant dense<0.000000e+00> : vector<48x64xf32>
    %9 = tpu.matmul %1, %8, %cst_9 {dimension_numbers = #tpu.dot_dimension_numbers<[1], [0], [0], [1], [0, 0, 1, 1], [], []>} : vector<48x32xbf16>, vector<32x64xbf16>, vector<48x64xf32> -> vector<48x64xf32>
    %c0_10 = arith.constant 0 : index
    %c0_11 = arith.constant 0 : index
    %10 = vector.load %arg3[%c0_10, %c0_11] : memref<1x64xf32, #tpu.memory_space<vmem>>, vector<1x64xf32>
    %11 = vector.broadcast %10 : vector<1x64xf32> to vector<48x64xf32>
    %12 = arith.addf %9, %11 : vector<48x64xf32>
    %cst_12 = arith.constant 0.000000e+00 : f32
    %13 = vector.broadcast %cst_12 : f32 to vector<48x64xf32>
    %14 = arith.maximumf %12, %13 : vector<48x64xf32>
    %15 = arith.truncf %14 : vector<48x64xf32> to vector<48x64xbf16>
    %c0_13 = arith.constant 0 : index
    %c0_14 = arith.constant 0 : index
    %16 = vector.load %arg4[%c0_13, %c0_14] : memref<64x64xbf16, #tpu.memory_space<vmem>>, vector<64x64xbf16>
    %cst_15 = arith.constant dense<0.000000e+00> : vector<48x64xf32>
    %17 = tpu.matmul %15, %16, %cst_15 {dimension_numbers = #tpu.dot_dimension_numbers<[1], [0], [0], [1], [0, 0, 1, 1], [], []>} : vector<48x64xbf16>, vector<64x64xbf16>, vector<48x64xf32> -> vector<48x64xf32>
    %c0_16 = arith.constant 0 : index
    %c0_17 = arith.constant 0 : index
    %18 = vector.load %arg5[%c0_16, %c0_17] : memref<1x64xf32, #tpu.memory_space<vmem>>, vector<1x64xf32>
    %19 = vector.broadcast %18 : vector<1x64xf32> to vector<48x64xf32>
    %20 = arith.addf %17, %19 : vector<48x64xf32>
    %cst_18 = arith.constant 0.000000e+00 : f32
    %21 = vector.broadcast %cst_18 : f32 to vector<48x64xf32>
    %22 = arith.maximumf %20, %21 : vector<48x64xf32>
    %23 = arith.truncf %22 : vector<48x64xf32> to vector<48x64xbf16>
    %c0_19 = arith.constant 0 : index
    %c0_20 = arith.constant 0 : index
    %24 = vector.load %arg7[%c0_19, %c0_20] : memref<64x128xbf16, #tpu.memory_space<vmem>>, vector<64x128xbf16>
    %cst_21 = arith.constant dense<0.000000e+00> : vector<48x128xf32>
    %25 = tpu.matmul %23, %24, %cst_21 {dimension_numbers = #tpu.dot_dimension_numbers<[1], [0], [0], [1], [0, 0, 1, 1], [], []>} : vector<48x64xbf16>, vector<64x128xbf16>, vector<48x128xf32> -> vector<48x128xf32>
    %c0_22 = arith.constant 0 : index
    %c0_23 = arith.constant 0 : index
    %26 = vector.load %arg9[%c0_22, %c0_23] : memref<1x128xf32, #tpu.memory_space<vmem>>, vector<1x128xf32>
    %27 = vector.broadcast %26 : vector<1x128xf32> to vector<48x128xf32>
    %28 = arith.addf %25, %27 : vector<48x128xf32>
    %29 = arith.negf %28 : vector<48x128xf32>
    %30 = math.exp %29 : vector<48x128xf32>
    %cst_24 = arith.constant 1.000000e+00 : f32
    %31 = vector.broadcast %cst_24 : f32 to vector<48x128xf32>
    %32 = arith.addf %31, %30 : vector<48x128xf32>
    %33 = arith.divf %31, %32 : vector<48x128xf32>
    %c0_25 = arith.constant 0 : index
    %c0_26 = arith.constant 0 : index
    %34 = vector.load %arg11[%c0_25, %c0_26] : memref<48x128xf32, #tpu.memory_space<vmem>>, vector<48x128xf32>
    tpu.vector_store %arg11[%c0_25, %c0_26], %33 {strides = array<i32>} : memref<48x128xf32, #tpu.memory_space<vmem>>, vector<48x128xf32>,
    return
  }
  func.func @transform_0(%arg0: i32) -> (i32, i32) {
    %c0_i32 = arith.constant 0 : i32
    %c0_i32_0 = arith.constant 0 : i32
    return %arg0, %c0_i32 : i32, i32
  }
  func.func @transform_1(%arg0: i32) -> (i32, i32) {
    %c0_i32 = arith.constant 0 : i32
    %c0_i32_0 = arith.constant 0 : i32
    %c0_i32_1 = arith.constant 0 : i32
    return %c0_i32, %c0_i32_0 : i32, i32
  }
  func.func @transform_2(%arg0: i32) -> (i32, i32) {
    %c0_i32 = arith.constant 0 : i32
    %c0_i32_0 = arith.constant 0 : i32
    %c0_i32_1 = arith.constant 0 : i32
    return %c0_i32, %c0_i32_0 : i32, i32
  }
  func.func @transform_3(%arg0: i32) -> (i32, i32) {
    %c0_i32 = arith.constant 0 : i32
    %c0_i32_0 = arith.constant 0 : i32
    %c0_i32_1 = arith.constant 0 : i32
    return %c0_i32, %c0_i32_0 : i32, i32
  }
  func.func @transform_4(%arg0: i32) -> (i32, i32) {
    %c0_i32 = arith.constant 0 : i32
    %c0_i32_0 = arith.constant 0 : i32
    %c0_i32_1 = arith.constant 0 : i32
    return %c0_i32, %c0_i32_0 : i32, i32
  }
  func.func @transform_5(%arg0: i32) -> (i32, i32) {
    %c0_i32 = arith.constant 0 : i32
    %c0_i32_0 = arith.constant 0 : i32
    %c0_i32_1 = arith.constant 0 : i32
    return %c0_i32, %c0_i32_0 : i32, i32
  }
  func.func @transform_6(%arg0: i32) -> (i32, i32) {
    %c0_i32 = arith.constant 0 : i32
    %c0_i32_0 = arith.constant 0 : i32
    %c0_i32_1 = arith.constant 0 : i32
    return %c0_i32, %c0_i32_0 : i32, i32
  }
  func.func @transform_7(%arg0: i32) -> (i32, i32) {
    %c0_i32 = arith.constant 0 : i32
    %c0_i32_0 = arith.constant 0 : i32
    %c0_i32_1 = arith.constant 0 : i32
    return %c0_i32, %c0_i32_0 : i32, i32
  }
  func.func @transform_8(%arg0: i32) -> (i32, i32) {
    %c0_i32 = arith.constant 0 : i32
    %c0_i32_0 = arith.constant 0 : i32
    %c0_i32_1 = arith.constant 0 : i32
    return %c0_i32, %c0_i32_0 : i32, i32
  }
  func.func @transform_9(%arg0: i32) -> (i32, i32) {
    %c0_i32 = arith.constant 0 : i32
    %c0_i32_0 = arith.constant 0 : i32
    return %arg0, %c0_i32 : i32, i32
  }
  func.func @transform_10(%arg0: i32) -> (i32, i32) {
    %c0_i32 = arith.constant 0 : i32
    %c0_i32_0 = arith.constant 0 : i32
    return %arg0, %c0_i32 : i32, i32
  }
}

</mosaic_0001>

<llo_original>
// kernel: tpu_custom_call.1
$region0: #{tpu_custom_call.1}
  #allocation0 [shape = 'u32[]', space=smem, size = 0x4, offset = 0x4, fixed_abs, tag = 'smem constant byte address 0x4 - core index']
  #allocation1 [shape = 'u32[144,128]{1,0:T(1,128)}', space=vmem, size = 0x12000, scoped, tag = 'internal scratch']
  %s0 = inlined_call_operand.vmem [shape: f32[48,32], index: 0, kind: input, shape index: {}]
  %s1 = inlined_call_operand.vmem [shape: bf16[32,64], index: 1, kind: input, shape index: {}]
  %s2 = inlined_call_operand.vmem [shape: f32[1,64], index: 2, kind: input, shape index: {}]
  %s3 = inlined_call_operand.vmem [shape: bf16[64,64], index: 3, kind: input, shape index: {}]
  %s4 = inlined_call_operand.vmem [shape: f32[1,64], index: 4, kind: input, shape index: {}]
  %s5 = inlined_call_operand.hbm [shape: bf16[32,128], index: 5, kind: input, shape index: {}]
  %s6 = inlined_call_operand.vmem [shape: bf16[64,128], index: 6, kind: input, shape index: {}]
  %s7 = inlined_call_operand.vmem [shape: f32[1,128], index: 7, kind: input, shape index: {}]
  %s8 = inlined_call_operand.vmem [shape: f32[1,128], index: 8, kind: input, shape index: {}]
  %s9 = inlined_call_operand.hbm [shape: f32[48,128], index: 9, kind: output, shape index: {0}]
  %s10 = inlined_call_operand.hbm [shape: f32[48,128], index: 10, kind: output, shape index: {1}]
  %11 = xla_tuple %s9, %s10
  %s12 = sld [smem:[#allocation0]]
  $region58: #{tpu_custom_call.1} parent=0
    _
  %s14 = ssub.s32 1, %s12
  %s15 = scalar_select 0, %s14, %s12
  $region1: #{tpu_custom_call.1} parent=0
    #allocation2 [shape = 'u8[8192]{0}', space=vmem, size = 0x2000, scoped, tag = 'input window, operand 5, single buffered']
    #allocation3 [shape = 's32[1]{0}', space=sflag, size = 0x4, scoped, tag = 'scoped memory for tpu_custom_call.1']
    #allocation4 [shape = 's32[1]{0}', space=sflag, size = 0x4, scoped, tag = 'scoped memory for tpu_custom_call.1']
    #allocation5 [shape = 'u8[24576]{0}', space=vmem, size = 0x6000, scoped, tag = 'output window, operand 0, single buffered']
    #allocation6 [shape = 'u8[24576]{0}', space=vmem, size = 0x6000, scoped, tag = 'output window, operand 1, single buffered']
    #allocation7 [shape = 's32[1]{0}', space=sflag, size = 0x4, scoped, tag = 'scoped memory for tpu_custom_call.1']
    %16 = vsyncpa [#allocation3], 0
    %17 = vsyncpa [#allocation4], 0
    %18 = vsyncpa [#allocation7], 0
    // Predicated region
    $region2: #{tpu_custom_call.1} parent=1 // pred_check
      _
    $region3: #{tpu_custom_call.1} parent=1 // pred_check_branch
      %20 = sbr.rel (0) target = $region5
    $region4: #{tpu_custom_call.1} parent=1 // pred_region
      _
    $region5: #{tpu_custom_call.1} parent=1 // pred_fallthru
      _
    // Predicated region
    $region6: #{tpu_custom_call.1} parent=1 // pred_check
      _
    $region7: #{tpu_custom_call.1} parent=1 // pred_check_branch
      %22 = sbr.rel (0) target = $region9
    $region8: #{tpu_custom_call.1} parent=1 // pred_region
      _
    $region9: #{tpu_custom_call.1} parent=1 // pred_fallthru
      _
    // Predicated region
    $region10: #{tpu_custom_call.1} parent=1 // pred_check
      _
    $region11: #{tpu_custom_call.1} parent=1 // pred_check_branch
      %24 = sbr.rel (0) target = $region13
    $region12: #{tpu_custom_call.1} parent=1 // pred_region
      _
    $region13: #{tpu_custom_call.1} parent=1 // pred_fallthru
      _
    // Predicated region
    $region14: #{tpu_custom_call.1} parent=1 // pred_check
      _
    $region15: #{tpu_custom_call.1} parent=1 // pred_check_branch
      %26 = sbr.rel (0) target = $region17
    $region16: #{tpu_custom_call.1} parent=1 // pred_region
      _
    $region17: #{tpu_custom_call.1} parent=1 // pred_fallthru
      _
    // Predicated region
    $region18: #{tpu_custom_call.1} parent=1 // pred_check
      _
    $region19: #{tpu_custom_call.1} parent=1 // pred_check_branch
      %28 = sbr.rel (0) target = $region21
    $region20: #{tpu_custom_call.1} parent=1 // pred_region
      _
    $region21: #{tpu_custom_call.1} parent=1 // pred_fallthru
      _
    // Predicated region
    $region22: #{tpu_custom_call.1} parent=1 // pred_check
      _
    $region23: #{tpu_custom_call.1} parent=1 // pred_check_branch
      %30 = sbr.rel (0) target = $region25
    $region24: #{tpu_custom_call.1} parent=1 // pred_region
      %s32 = ssub.s32 256, 256
      %33 = vsyncadd [#allocation3], %s32
      %s34 = sshll.u32 [#allocation2], 4
      %s35 = int_to_ptr.vmem [resolvable:$true] %s34
      %40 = dma.hbm_to_vmem [thread:$0]  %s5, 256, %s35, [#allocation3], 64, 64, 4
    $region25: #{tpu_custom_call.1} parent=1 // pred_fallthru
      _
    // Predicated region
    $region26: #{tpu_custom_call.1} parent=1 // pred_check
      _
    $region27: #{tpu_custom_call.1} parent=1 // pred_check_branch
      %42 = sbr.rel (0) target = $region29
    $region28: #{tpu_custom_call.1} parent=1 // pred_region
      _
    $region29: #{tpu_custom_call.1} parent=1 // pred_fallthru
      _
    // Predicated region
    $region30: #{tpu_custom_call.1} parent=1 // pred_check
      _
    $region31: #{tpu_custom_call.1} parent=1 // pred_check_branch
      %44 = sbr.rel (0) target = $region33
    $region32: #{tpu_custom_call.1} parent=1 // pred_region
      _
    $region33: #{tpu_custom_call.1} parent=1 // pred_fallthru
      _
    // Predicated region
    $region34: #{tpu_custom_call.1} parent=1 // pred_check
      _
    $region35: #{tpu_custom_call.1} parent=1 // pred_check_branch
      %46 = sbr.rel (0) target = $region37
    $region36: #{tpu_custom_call.1} parent=1 // pred_region
      _
    $region37: #{tpu_custom_call.1} parent=1 // pred_fallthru
      _
    // Predicated region
    $region38: #{tpu_custom_call.1} parent=1 // pred_check
      _
    $region39: #{tpu_custom_call.1} parent=1 // pred_check_branch
      %48 = sbr.rel (0) target = $region41
    $region40: #{tpu_custom_call.1} parent=1 // pred_region
      %49 = dma.done [#allocation3], 256
    $region41: #{tpu_custom_call.1} parent=1 // pred_fallthru
      _
    %v51 = vld [vmem:[%s0] sm:$0xff]
    %v52 = vld [vmem:[%s0 + $0x8] sm:$0xff]
    %v53 = vld [vmem:[%s0 + $0x10] sm:$0xff]
    %v54 = vld [vmem:[%s0 + $0x18] sm:$0xff]
    %v55 = vld [vmem:[%s0 + $0x20] sm:$0xff]
    %v56 = vld [vmem:[%s0 + $0x28] sm:$0xff]
    %v57 = vpack.c.bf16 %v52, %v51
    %v58 = vpack.c.bf16 %v54, %v53
    %v59 = vpack.c.bf16 %v56, %v55
    %v60 = vld [vmem:[#allocation2] sm:$0xf]
    %v61 = vld [vmem:[#allocation2 + $0x4] sm:$0xf]
    %v62 = vld [vmem:[#allocation2 + $0x8] sm:$0xf]
    %v63 = vld [vmem:[#allocation2 + $0xc] sm:$0xf]
    %v64 = vld [vmem:[%s7] sm:$0x1]
    %v66 = vlaneseq
    %v67 = vshrl.u32 %v66, 7
    %v68 = vsub.s32 0, %v67
    %v69 = vrot.slane %v64, %v68
    %v75 = vunpack.c.l.b16 %v60
    %v76 = vunpack.c.l.b16 %v61
    %v77 = vunpack.c.l.b16 %v62
    %v78 = vunpack.c.l.b16 %v63
    %v79 = vpack.c.b16 %v76, %v75
    %v80 = vpack.c.b16 %v78, %v77
    %vm83 = vcmask 261120
    %v85 = vsel %vm83, %v57, 0
    %v88 = vsel %vm83, %v58, 0
    %v91 = vsel %vm83, %v59, 0
    %93 = vmatprep.subr.bf16.mxu0 0
    %94 = vmatpush1.bf16.msra.mxu0 0
    %95 = vmatprep.subr.bf16.mxu0 0
    %96 = vmatpush1.bf16.msra.mxu0 0
    %97 = vmatprep.subr.bf16.mxu0 0
    %98 = vmatpush1.bf16.msra.mxu0 0
    %99 = vmatprep.subr.bf16.mxu0 0
    %100 = vmatpush1.bf16.msra.mxu0 0
    %101 = vmatprep.subr.bf16.mxu0 0
    %102 = vmatpush1.bf16.msra.mxu0 0
    %103 = vmatprep.subr.bf16.mxu0 0
    %104 = vmatpush1.bf16.msra.mxu0 0
    %105 = vmatprep.subr.bf16.mxu0 0
    %106 = vmatpush1.bf16.msra.mxu0 %v80
    %107 = vmatprep.subr.bf16.mxu0 0
    %108 = vmatpush1.bf16.msra.mxu0 %v79
    %109 = vmatprep.subr.bf16.mxu0 0
    %110 = vmatpush2.bf16.msra.mxu0 0
    %111 = vmatprep.subr.bf16.mxu0 0
    %112 = vmatpush2.bf16.msra.mxu0 0
    %113 = vmatprep.subr.bf16.mxu0 0
    %114 = vmatpush2.bf16.msra.mxu0 0
    %115 = vmatprep.subr.bf16.mxu0 0
    %116 = vmatpush2.bf16.msra.mxu0 0
    %117 = vmatprep.subr.bf16.mxu0 0
    %118 = vmatpush2.bf16.msra.mxu0 0
    %119 = vmatprep.subr.bf16.mxu0 0
    %120 = vmatpush2.bf16.msra.mxu0 0
    %121 = vmatprep.subr.bf16.mxu0 0
    %122 = vmatpush2.bf16.msra.mxu0 0
    %123 = vmatprep.subr.bf16.mxu0 0
    %124 = vmatpush2.bf16.msra.mxu0 0
    %125 = vmatprep.mubr.bf16.mxu0 0
    %126 = vmatmul.mubr.bf16.gmra.mxu0 %v85
    %v127 = vpop.f32.mrf.mxu0
    %v128 = vadd.f32 %v69, %v127
    %v129 = vpop.f32.mrf.mxu0
    %v130 = vpop.f32.mrf.mxu0
    %v131 = vadd.f32 %v69, %v130
    %v132 = vpop.f32.mrf.mxu0
    %133 = vmatprep.mubr.bf16.mxu0 0
    %134 = vmatmul.mubr.bf16.gmra.mxu0 %v88
    %v135 = vpop.f32.mrf.mxu0
    %v136 = vadd.f32 %v69, %v135
    %v137 = vpop.f32.mrf.mxu0
    %v138 = vpop.f32.mrf.mxu0
    %v139 = vadd.f32 %v69, %v138
    %v140 = vpop.f32.mrf.mxu0
    %141 = vmatprep.mubr.bf16.mxu0 0
    %142 = vmatmul.mubr.bf16.gmra.mxu0 %v91
    %v143 = vpop.f32.mrf.mxu0
    %v144 = vadd.f32 %v69, %v143
    %v145 = vpop.f32.mrf.mxu0
    %v146 = vpop.f32.mrf.mxu0
    %v147 = vadd.f32 %v69, %v146
    %v148 = vpop.f32.mrf.mxu0
    %149 = vdwg.mxu0
    %150 = vst [vmem:[#allocation5] sm:$0xff] %v128
    %151 = vst [vmem:[#allocation5 + $0x8] sm:$0xff] %v131
    %152 = vst [vmem:[#allocation5 + $0x10] sm:$0xff] %v136
    %153 = vst [vmem:[#allocation5 + $0x18] sm:$0xff] %v139
    %154 = vst [vmem:[#allocation5 + $0x20] sm:$0xff] %v144
    %155 = vst [vmem:[#allocation5 + $0x28] sm:$0xff] %v147
    %v156 = vld [vmem:[%s1] sm:$0xf]
    %v157 = vld [vmem:[%s1 + $0x4] sm:$0xf]
    %v158 = vld [vmem:[%s1 + $0x8] sm:$0xf]
    %v159 = vld [vmem:[%s1 + $0xc] sm:$0xf]
    %v160 = vld [vmem:[%s2] sm:$0x1]
    %v162 = vlaneseq
    %v163 = vshrl.u32 %v162, 7
    %v164 = vsub.s32 0, %v163
    %v165 = vrot.slane %v160, %v164
    %v171 = vunpack.c.l.b16 %v156
    %v172 = vunpack.c.l.b16 %v157
    %v173 = vunpack.c.l.b16 %v158
    %v174 = vunpack.c.l.b16 %v159
    %v175 = vpack.c.b16 %v172, %v171
    %v176 = vpack.c.b16 %v174, %v173
    %179 = vmatprep.subr.bf16.mxu0 0
    %180 = vmatpush1.bf16.msra.mxu0 0
    %181 = vmatprep.subr.bf16.mxu0 0
    %182 = vmatpush1.bf16.msra.mxu0 0
    %183 = vmatprep.subr.bf16.mxu0 0
    %184 = vmatpush1.bf16.msra.mxu0 0
    %185 = vmatprep.subr.bf16.mxu0 0
    %186 = vmatpush1.bf16.msra.mxu0 0
    %187 = vmatprep.subr.bf16.mxu0 0
    %188 = vmatpush1.bf16.msra.mxu0 0
    %189 = vmatprep.subr.bf16.mxu0 0
    %190 = vmatpush1.bf16.msra.mxu0 0
    %191 = vmatprep.subr.bf16.mxu0 0
    %192 = vmatpush1.bf16.msra.mxu0 %v176
    %193 = vmatprep.subr.bf16.mxu0 0
    %194 = vmatpush1.bf16.msra.mxu0 %v175
    %195 = vmatprep.subr.bf16.mxu0 0
    %196 = vmatpush2.bf16.msra.mxu0 0
    %197 = vmatprep.subr.bf16.mxu0 0
    %198 = vmatpush2.bf16.msra.mxu0 0
    %199 = vmatprep.subr.bf16.mxu0 0
    %200 = vmatpush2.bf16.msra.mxu0 0
    %201 = vmatprep.subr.bf16.mxu0 0
    %202 = vmatpush2.bf16.msra.mxu0 0
    %203 = vmatprep.subr.bf16.mxu0 0
    %204 = vmatpush2.bf16.msra.mxu0 0
    %205 = vmatprep.subr.bf16.mxu0 0
    %206 = vmatpush2.bf16.msra.mxu0 0
    %207 = vmatprep.subr.bf16.mxu0 0
    %208 = vmatpush2.bf16.msra.mxu0 0
    %209 = vmatprep.subr.bf16.mxu0 0
    %210 = vmatpush2.bf16.msra.mxu0 0
    %211 = vmatprep.mubr.bf16.mxu0 0
    %212 = vmatmul.mubr.bf16.gmra.mxu0 %v85
    %v213 = vpop.f32.mrf.mxu0
    %v214 = vadd.f32 %v165, %v213
    %v215 = vpop.f32.mrf.mxu0
    %v216 = vpop.f32.mrf.mxu0
    %v217 = vadd.f32 %v165, %v216
    %v218 = vpop.f32.mrf.mxu0
    %219 = vmatprep.mubr.bf16.mxu0 0
    %220 = vmatmul.mubr.bf16.gmra.mxu0 %v88
    %v221 = vpop.f32.mrf.mxu0
    %v222 = vadd.f32 %v165, %v221
    %v223 = vpop.f32.mrf.mxu0
    %v224 = vpop.f32.mrf.mxu0
    %v225 = vadd.f32 %v165, %v224
    %v226 = vpop.f32.mrf.mxu0
    %227 = vmatprep.mubr.bf16.mxu0 0
    %228 = vmatmul.mubr.bf16.gmra.mxu0 %v91
    %v229 = vpop.f32.mrf.mxu0
    %v230 = vadd.f32 %v165, %v229
    %v231 = vpop.f32.mrf.mxu0
    %v232 = vpop.f32.mrf.mxu0
    %v233 = vadd.f32 %v165, %v232
    %v234 = vpop.f32.mrf.mxu0
    %235 = vdwg.mxu0
    %v236 = vmax.f32 %v214, 0.0
    %v237 = vmax.f32 %v217, 0.0
    %v238 = vmax.f32 %v222, 0.0
    %v239 = vmax.f32 %v225, 0.0
    %v240 = vmax.f32 %v230, 0.0
    %v241 = vmax.f32 %v233, 0.0
    %v242 = vpack.c.bf16 %v237, %v236
    %v243 = vpack.c.bf16 %v239, %v238
    %v244 = vpack.c.bf16 %v241, %v240
    %v245 = vld [vmem:[%s3] sm:$0xf]
    %v246 = vld [vmem:[%s3 + $0x4] sm:$0xf]
    %v247 = vld [vmem:[%s3 + $0x8] sm:$0xf]
    %v248 = vld [vmem:[%s3 + $0xc] sm:$0xf]
    %v249 = vld [vmem:[%s3 + $0x10] sm:$0xf]
    %v250 = vld [vmem:[%s3 + $0x14] sm:$0xf]
    %v251 = vld [vmem:[%s3 + $0x18] sm:$0xf]
    %v252 = vld [vmem:[%s3 + $0x1c] sm:$0xf]
    %v253 = vld [vmem:[%s4] sm:$0x1]
    %v255 = vlaneseq
    %v256 = vshrl.u32 %v255, 7
    %v257 = vsub.s32 0, %v256
    %v258 = vrot.slane %v253, %v257
    %v268 = vunpack.c.l.b16 %v245
    %v269 = vunpack.c.l.b16 %v246
    %v270 = vunpack.c.l.b16 %v247
    %v271 = vunpack.c.l.b16 %v248
    %v272 = vunpack.c.l.b16 %v249
    %v273 = vunpack.c.l.b16 %v250
    %v274 = vunpack.c.l.b16 %v251
    %v275 = vunpack.c.l.b16 %v252
    %v276 = vpack.c.b16 %v269, %v268
    %v277 = vpack.c.b16 %v271, %v270
    %v278 = vpack.c.b16 %v273, %v272
    %v279 = vpack.c.b16 %v275, %v274
    %vm284 = vcmask 523264
    %v286 = vsel %vm284, %v242, 0
    %v289 = vsel %vm284, %v243, 0
    %v292 = vsel %vm284, %v244, 0
    %294 = vmatprep.subr.bf16.mxu0 0
    %295 = vmatpush1.bf16.msra.mxu0 0
    %296 = vmatprep.subr.bf16.mxu0 0
    %297 = vmatpush1.bf16.msra.mxu0 0
    %298 = vmatprep.subr.bf16.mxu0 0
    %299 = vmatpush1.bf16.msra.mxu0 0
    %300 = vmatprep.subr.bf16.mxu0 0
    %301 = vmatpush1.bf16.msra.mxu0 0
    %302 = vmatprep.subr.bf16.mxu0 0
    %303 = vmatpush1.bf16.msra.mxu0 %v279
    %304 = vmatprep.subr.bf16.mxu0 0
    %305 = vmatpush1.bf16.msra.mxu0 %v278
    %306 = vmatprep.subr.bf16.mxu0 0
    %307 = vmatpush1.bf16.msra.mxu0 %v277
    %308 = vmatprep.subr.bf16.mxu0 0
    %309 = vmatpush1.bf16.msra.mxu0 %v276
    %310 = vmatprep.subr.bf16.mxu0 0
    %311 = vmatpush2.bf16.msra.mxu0 0
    %312 = vmatprep.subr.bf16.mxu0 0
    %313 = vmatpush2.bf16.msra.mxu0 0
    %314 = vmatprep.subr.bf16.mxu0 0
    %315 = vmatpush2.bf16.msra.mxu0 0
    %316 = vmatprep.subr.bf16.mxu0 0
    %317 = vmatpush2.bf16.msra.mxu0 0
    %318 = vmatprep.subr.bf16.mxu0 0
    %319 = vmatpush2.bf16.msra.mxu0 0
    %320 = vmatprep.subr.bf16.mxu0 0
    %321 = vmatpush2.bf16.msra.mxu0 0
    %322 = vmatprep.subr.bf16.mxu0 0
    %323 = vmatpush2.bf16.msra.mxu0 0
    %324 = vmatprep.subr.bf16.mxu0 0
    %325 = vmatpush2.bf16.msra.mxu0 0
    %326 = vmatprep.mubr.bf16.mxu0 0
    %327 = vmatmul.mubr.bf16.gmra.mxu0 %v286
    %v328 = vpop.f32.mrf.mxu0
    %v329 = vadd.f32 %v258, %v328
    %v330 = vpop.f32.mrf.mxu0
    %v331 = vpop.f32.mrf.mxu0
    %v332 = vadd.f32 %v258, %v331
    %v333 = vpop.f32.mrf.mxu0
    %334 = vmatprep.mubr.bf16.mxu0 0
    %335 = vmatmul.mubr.bf16.gmra.mxu0 %v289
    %v336 = vpop.f32.mrf.mxu0
    %v337 = vadd.f32 %v258, %v336
    %v338 = vpop.f32.mrf.mxu0
    %v339 = vpop.f32.mrf.mxu0
    %v340 = vadd.f32 %v258, %v339
    %v341 = vpop.f32.mrf.mxu0
    %342 = vmatprep.mubr.bf16.mxu0 0
    %343 = vmatmul.mubr.bf16.gmra.mxu0 %v292
    %v344 = vpop.f32.mrf.mxu0
    %v345 = vadd.f32 %v258, %v344
    %v346 = vpop.f32.mrf.mxu0
    %v347 = vpop.f32.mrf.mxu0
    %v348 = vadd.f32 %v258, %v347
    %v349 = vpop.f32.mrf.mxu0
    %350 = vdwg.mxu0
    %v351 = vmax.f32 %v329, 0.0
    %v352 = vmax.f32 %v332, 0.0
    %v353 = vmax.f32 %v337, 0.0
    %v354 = vmax.f32 %v340, 0.0
    %v355 = vmax.f32 %v345, 0.0
    %v356 = vmax.f32 %v348, 0.0
    %v357 = vpack.c.bf16 %v352, %v351
    %v358 = vpack.c.bf16 %v354, %v353
    %v359 = vpack.c.bf16 %v356, %v355
    %v360 = vld [vmem:[%s6] sm:$0xf]
    %v361 = vld [vmem:[%s6 + $0x4] sm:$0xf]
    %v362 = vld [vmem:[%s6 + $0x8] sm:$0xf]
    %v363 = vld [vmem:[%s6 + $0xc] sm:$0xf]
    %v364 = vld [vmem:[%s6 + $0x10] sm:$0xf]
    %v365 = vld [vmem:[%s6 + $0x14] sm:$0xf]
    %v366 = vld [vmem:[%s6 + $0x18] sm:$0xf]
    %v367 = vld [vmem:[%s6 + $0x1c] sm:$0xf]
    %v368 = vld [vmem:[%s8] sm:$0x1]
    %v370 = vlaneseq
    %v371 = vshrl.u32 %v370, 7
    %v372 = vsub.s32 0, %v371
    %v373 = vrot.slane %v368, %v372
    %v383 = vunpack.c.l.b16 %v360
    %v384 = vunpack.c.l.b16 %v361
    %v385 = vunpack.c.l.b16 %v362
    %v386 = vunpack.c.l.b16 %v363
    %v387 = vunpack.c.l.b16 %v364
    %v388 = vunpack.c.l.b16 %v365
    %v389 = vunpack.c.l.b16 %v366
    %v390 = vunpack.c.l.b16 %v367
    %v391 = vpack.c.b16 %v384, %v383
    %v392 = vpack.c.b16 %v386, %v385
    %v393 = vpack.c.b16 %v388, %v387
    %v394 = vpack.c.b16 %v390, %v389
    %v400 = vsel %vm284, %v357, 0
    %v403 = vsel %vm284, %v358, 0
    %v406 = vsel %vm284, %v359, 0
    %408 = vmatprep.subr.bf16.mxu0 0
    %409 = vmatpush1.bf16.msra.mxu0 0
    %410 = vmatprep.subr.bf16.mxu0 0
    %411 = vmatpush1.bf16.msra.mxu0 0
    %412 = vmatprep.subr.bf16.mxu0 0
    %413 = vmatpush1.bf16.msra.mxu0 0
    %414 = vmatprep.subr.bf16.mxu0 0
    %415 = vmatpush1.bf16.msra.mxu0 0
    %416 = vmatprep.subr.bf16.mxu0 0
    %417 = vmatpush1.bf16.msra.mxu0 %v394
    %418 = vmatprep.subr.bf16.mxu0 0
    %419 = vmatpush1.bf16.msra.mxu0 %v393
    %420 = vmatprep.subr.bf16.mxu0 0
    %421 = vmatpush1.bf16.msra.mxu0 %v392
    %422 = vmatprep.subr.bf16.mxu0 0
    %423 = vmatpush1.bf16.msra.mxu0 %v391
    %424 = vmatprep.subr.bf16.mxu0 0
    %425 = vmatpush2.bf16.msra.mxu0 0
    %426 = vmatprep.subr.bf16.mxu0 0
    %427 = vmatpush2.bf16.msra.mxu0 0
    %428 = vmatprep.subr.bf16.mxu0 0
    %429 = vmatpush2.bf16.msra.mxu0 0
    %430 = vmatprep.subr.bf16.mxu0 0
    %431 = vmatpush2.bf16.msra.mxu0 0
    %432 = vmatprep.subr.bf16.mxu0 0
    %433 = vmatpush2.bf16.msra.mxu0 0
    %434 = vmatprep.subr.bf16.mxu0 0
    %435 = vmatpush2.bf16.msra.mxu0 0
    %436 = vmatprep.subr.bf16.mxu0 0
    %437 = vmatpush2.bf16.msra.mxu0 0
    %438 = vmatprep.subr.bf16.mxu0 0
    %439 = vmatpush2.bf16.msra.mxu0 0
    %440 = vmatprep.mubr.bf16.mxu0 0
    %441 = vmatmul.mubr.bf16.gmra.mxu0 %v400
    %v442 = vpop.f32.mrf.mxu0
    %v443 = vadd.f32 %v373, %v442
    %v444 = vpop.f32.mrf.mxu0
    %v445 = vpop.f32.mrf.mxu0
    %v446 = vadd.f32 %v373, %v445
    %v447 = vpop.f32.mrf.mxu0
    %448 = vmatprep.mubr.bf16.mxu0 0
    %449 = vmatmul.mubr.bf16.gmra.mxu0 %v403
    %v450 = vpop.f32.mrf.mxu0
    %v451 = vadd.f32 %v373, %v450
    %v452 = vpop.f32.mrf.mxu0
    %v453 = vpop.f32.mrf.mxu0
    %v454 = vadd.f32 %v373, %v453
    %v455 = vpop.f32.mrf.mxu0
    %456 = vmatprep.mubr.bf16.mxu0 0
    %457 = vmatmul.mubr.bf16.gmra.mxu0 %v406
    %v458 = vpop.f32.mrf.mxu0
    %v459 = vadd.f32 %v373, %v458
    %v460 = vpop.f32.mrf.mxu0
    %v461 = vpop.f32.mrf.mxu0
    %v462 = vadd.f32 %v373, %v461
    %v463 = vpop.f32.mrf.mxu0
    %464 = vdwg.mxu0
    %v465 = vxor.u32 %v443, 2147483648
    %v466 = vxor.u32 %v446, 2147483648
    %v467 = vxor.u32 %v451, 2147483648
    %v468 = vxor.u32 %v454, 2147483648
    %v469 = vxor.u32 %v459, 2147483648
    %v470 = vxor.u32 %v462, 2147483648
    %v471 = vmul.f32 %v465, 1.442695
    %v472 = vpow.pop %v471
    %v473 = vmul.f32 %v466, 1.442695
    %v474 = vpow.pop %v473
    %v475 = vmul.f32 %v467, 1.442695
    %v476 = vpow.pop %v475
    %v477 = vmul.f32 %v468, 1.442695
    %v478 = vpow.pop %v477
    %v479 = vmul.f32 %v469, 1.442695
    %v480 = vpow.pop %v479
    %v481 = vmul.f32 %v470, 1.442695
    %v482 = vpow.pop %v481
    %v483 = vadd.f32 %v472, 1.0
    %v484 = vadd.f32 %v474, 1.0
    %v485 = vadd.f32 %v476, 1.0
    %v486 = vadd.f32 %v478, 1.0
    %v487 = vadd.f32 %v480, 1.0
    %v488 = vadd.f32 %v482, 1.0
    %v489 = vrcp.pop %v483
    %v490 = vmul.f32 1.0, %v489
    %v491 = vrcp.pop %v484
    %v492 = vmul.f32 1.0, %v491
    %v493 = vrcp.pop %v485
    %v494 = vmul.f32 1.0, %v493
    %v495 = vrcp.pop %v486
    %v496 = vmul.f32 1.0, %v495
    %v497 = vrcp.pop %v487
    %v498 = vmul.f32 1.0, %v497
    %v499 = vrcp.pop %v488
    %v500 = vmul.f32 1.0, %v499
    %501 = vst [vmem:[#allocation6] sm:$0xff] %v490
    %502 = vst [vmem:[#allocation6 + $0x8] sm:$0xff] %v492
    %503 = vst [vmem:[#allocation6 + $0x10] sm:$0xff] %v494
    %504 = vst [vmem:[#allocation6 + $0x18] sm:$0xff] %v496
    %505 = vst [vmem:[#allocation6 + $0x20] sm:$0xff] %v498
    %506 = vst [vmem:[#allocation6 + $0x28] sm:$0xff] %v500
    // Predicated region
    $region42: #{tpu_custom_call.1} parent=1 // pred_check
      _
    $region43: #{tpu_custom_call.1} parent=1 // pred_check_branch
      %508 = sbr.rel (0) target = $region45
    $region44: #{tpu_custom_call.1} parent=1 // pred_region
      %s510 = ssub.s32 768, 768
      %511 = vsyncadd [#allocation4], %s510
      %s512 = sshll.u32 [#allocation5], 4
      %s513 = int_to_ptr.vmem [resolvable:$true] %s512
      %518 = dma.vmem_to_hbm [thread:$0]  %s513, 768, %s9, [#allocation4], 128, 128, 8
    $region45: #{tpu_custom_call.1} parent=1 // pred_fallthru
      _
    // Predicated region
    $region46: #{tpu_custom_call.1} parent=1 // pred_check
      _
    $region47: #{tpu_custom_call.1} parent=1 // pred_check_branch
      %520 = sbr.rel (0) target = $region49
    $region48: #{tpu_custom_call.1} parent=1 // pred_region
      %s522 = ssub.s32 768, 768
      %523 = vsyncadd [#allocation7], %s522
      %s524 = sshll.u32 [#allocation6], 4
      %s525 = int_to_ptr.vmem [resolvable:$true] %s524
      %530 = dma.vmem_to_hbm [thread:$0]  %s525, 768, %s10, [#allocation7], 128, 128, 8
    $region49: #{tpu_custom_call.1} parent=1 // pred_fallthru
      _
    // Predicated region
    $region50: #{tpu_custom_call.1} parent=1 // pred_check
      _
    $region51: #{tpu_custom_call.1} parent=1 // pred_check_branch
      %532 = sbr.rel (0) target = $region53
    $region52: #{tpu_custom_call.1} parent=1 // pred_region
      %533 = dma.done [#allocation4], 768
    $region53: #{tpu_custom_call.1} parent=1 // pred_fallthru
      _
    // Predicated region
    $region54: #{tpu_custom_call.1} parent=1 // pred_check
      _
    $region55: #{tpu_custom_call.1} parent=1 // pred_check_branch
      %535 = sbr.rel (0) target = $region57
    $region56: #{tpu_custom_call.1} parent=1 // pred_region
      %536 = dma.done [#allocation7], 768
    $region57: #{tpu_custom_call.1} parent=1 // pred_fallthru
      _
    %537 = vsyncpa [#allocation3], 1
    %538 = vsyncpa [#allocation4], 1
    %539 = vsyncpa [#allocation7], 1

</llo_original>
